<compile_context>
chip_gen: v7x
topology: tpu7x:2x2x1
jax: 0.10.0
libtpu: 0.0.40
codegen_flags: <defaults>
</compile_context>

<pallas_src>
import jax
import jax.numpy as jnp
from jax.experimental import pallas as pl
from jax.experimental.pallas import tpu as pltpu


def _fused_conv1x1x3_kernel(w_ref, c_ref, x_ref, o_ref):
    """One image per grid step.

    w_ref: SMEM (Cout, Cin)  effective weight  (W3·W2·W1)
    c_ref: SMEM (3, Cout)    ring constants; c_ref[2] doubles as interior bias
    x_ref: VMEM (1, Cin, H, W)       input image (NCHW block)
    o_ref: VMEM (1, Cout, H+6, W+6)  output image (NCHW block)
    """
    _, cin, h, w = x_ref.shape
    _, cout, hp, wp = o_ref.shape

    for c in range(cout):
        # --- three nested constant frames (the 1-px rings created by the
        #     three successive padding=1 zero-pads) ------------------------
        o_ref[0, c, :, :] = jnp.full((hp, wp), c_ref[0, c], dtype=jnp.float32)
        o_ref[0, c, 1:hp - 1, 1:wp - 1] = jnp.full(
            (hp - 2, wp - 2), c_ref[1, c], dtype=jnp.float32)
        o_ref[0, c, 2:hp - 2, 2:wp - 2] = jnp.full(
            (hp - 4, wp - 4), c_ref[2, c], dtype=jnp.float32)

        # --- interior: per-pixel Cin->Cout channel mix as unrolled VPU FMAs
        #     (contraction dims of 3/7/8 would give <1% MXU utilization, so
        #      stay on the VPU; bias already includes "- other") -----------
        acc = jnp.full((h, w), c_ref[2, c], dtype=jnp.float32)
        for k in range(cin):
            acc = acc + w_ref[c, k] * x_ref[0, k, :, :]
        o_ref[0, c, 3:3 + h, 3:3 + w] = acc.astype(o_ref.dtype)


def model_forward(x_nchw, params, other=1.7):
    """Pallas implementation of Model.forward.

    x_nchw: (N, 3, H, W) float32  ->  (N, 2, H+6, W+6) float32
    """
    # TODO(synk): the `padding1`/`padding2` branch in the PyTorch forward
    # references an undefined global (`padding2`) and can never execute; it is
    # intentionally omitted.
    w1, b1, w2, b2, w3, b3 = params          # w*: (Cin, Cout), b*: (Cout,)

    # Tiny parameter pre-combination (O(100) flops, data-size independent).
    w_chain = w1 @ w2 @ w3                                   # (3, 2)
    w_eff = w_chain.T.astype(jnp.float32)                    # (2, 3) = [cout, cin]
    c0 = (b3 - other).astype(jnp.float32)                    # outermost ring
    c1 = (b2 @ w3 + c0).astype(jnp.float32)                  # middle ring
    c2 = (b1 @ (w2 @ w3) + c1).astype(jnp.float32)           # inner ring / interior bias
    cring = jnp.stack([c0, c1, c2], axis=0)                  # (3, 2)

    N, Cin, H, W = x_nchw.shape
    Cout = w3.shape[1]
    Hp, Wp = H + 6, W + 6

    # TODO(synk): for very large H*W, additionally tile rows (second grid axis)
    # and raise vmem_limit_bytes; at typical image sizes one image per block is
    # small and fully pipelined across the batch grid.
    out = pl.pallas_call(
        _fused_conv1x1x3_kernel,
        out_shape=jax.ShapeDtypeStruct((N, Cout, Hp, Wp), jnp.float32),
        grid=(N,),
        in_specs=[
            pl.BlockSpec(memory_space=pltpu.MemorySpace.SMEM),   # w_eff
            pl.BlockSpec(memory_space=pltpu.MemorySpace.SMEM),   # ring constants
            pl.BlockSpec((1, Cin, H, W), lambda n: (n, 0, 0, 0)),
        ],
        out_specs=pl.BlockSpec((1, Cout, Hp, Wp), lambda n: (n, 0, 0, 0)),
        compiler_params=pltpu.CompilerParams(
            dimension_semantics=("parallel",),   # shard batch across v7x's 2 TCs
        ),
    )(w_eff, cring, x_nchw)

    return out


def init_params(key):
    """Deterministic params matching Conv2d(3,7,1), Conv2d(7,8,1), Conv2d(8,2,1).

    PyTorch stores conv weights as (Cout, Cin, 1, 1); we keep the equivalent
    (Cin, Cout) matrices for the per-pixel channel mix.
    """
    ks = jax.random.split(key, 6)

    def uinit(k, cin, cout):
        bound = 1.0 / (cin ** 0.5)
        return jax.random.uniform(k, (cin, cout), jnp.float32, -bound, bound)

    w1 = uinit(ks[0], 3, 7)
    b1 = jax.random.uniform(ks[1], (7,), jnp.float32, -1.0 / 3 ** 0.5, 1.0 / 3 ** 0.5)
    w2 = uinit(ks[2], 7, 8)
    b2 = jax.random.uniform(ks[3], (8,), jnp.float32, -1.0 / 7 ** 0.5, 1.0 / 7 ** 0.5)
    w3 = uinit(ks[4], 8, 2)
    b3 = jax.random.uniform(ks[5], (2,), jnp.float32, -1.0 / 8 ** 0.5, 1.0 / 8 ** 0.5)
    return (w1, b1, w2, b2, w3, b3)


def _reference_forward(x_nchw, params, other=1.7):
    """Plain-JAX reference (lax conv, sequential stages) for correctness check."""
    w1, b1, w2, b2, w3, b3 = params

    def conv(x, w, b):
        k = w.T.reshape(w.shape[1], w.shape[0], 1, 1)       # (Cout, Cin, 1, 1)
        y = jax.lax.conv_general_dilated(
            x, k, window_strides=(1, 1), padding=((1, 1), (1, 1)),
            dimension_numbers=("NCHW", "OIHW", "NCHW"))
        return y + b.reshape(1, -1, 1, 1)

    v1 = conv(x_nchw, w1, b1)
    v2 = conv(v1, w2, b2)
    v3 = conv(v2, w3, b3)
    return v3 - other


if __name__ == "__main__":
    key = jax.random.PRNGKey(0)
    kx, kp = jax.random.split(key)

    x = jax.random.normal(kx, (2, 3, 16, 16), dtype=jnp.float32)
    params = init_params(kp)

    out = jax.block_until_ready(model_forward(x, params, other=1.7))
    assert out.shape == (2, 2, 22, 22), out.shape

    ref = jax.block_until_ready(_reference_forward(x, params, other=1.7))
    # small atol slack: the fused kernel reassociates the 3-stage matmul chain
    max_err = float(jnp.max(jnp.abs(out - ref)))
    assert jnp.allclose(out, ref, atol=1e-4, rtol=1e-4), f"mismatch, max_err={max_err}"

    print("KERNEL_OK")
</pallas_src>

<mosaic_0001>
module attributes {stable_mosaic.version = 11 : i64} {
  func.func @_fused_conv1x1x3_kernel(%arg0: i32, %arg1: memref<2x3xf32, #tpu.memory_space<smem>>, %arg2: memref<3x2xf32, #tpu.memory_space<smem>>, %arg3: memref<1x3x16x16xf32, #tpu.memory_space<vmem>>, %arg4: memref<1x2x22x22xf32, #tpu.memory_space<vmem>>) attributes {dimension_semantics = [#tpu.dimension_semantics<parallel>], iteration_bounds = array<i64: 2>, scalar_prefetch = 0 : i64, scratch_operands = 0 : i64, tpu.core_type = #tpu.core_type<tc>, window_params = [{transform_indices = @transform_0, window_bounds = array<i64: 2, 3>}, {transform_indices = @transform_1, window_bounds = array<i64: 3, 2>}, {transform_indices = @transform_2, window_bounds = array<i64: 1, 3, 16, 16>}, {transform_indices = @transform_3, window_bounds = array<i64: 1, 2, 22, 22>}]} {
    %c0 = arith.constant 0 : index
    %c0_0 = arith.constant 0 : index
    %0 = memref.load %arg2[%c0, %c0_0] : memref<3x2xf32, #tpu.memory_space<smem>>
    %1 = vector.broadcast %0 : f32 to vector<22x22xf32>
    %c0_1 = arith.constant 0 : index
    %c0_2 = arith.constant 0 : index
    %c0_3 = arith.constant 0 : index
    %c0_4 = arith.constant 0 : index
    %2 = vector.load %arg4[%c0_1, %c0_2, %c0_3, %c0_4] : memref<1x2x22x22xf32, #tpu.memory_space<vmem>>, vector<1x1x22x22xf32>
    %3 = vector.shape_cast %2 : vector<1x1x22x22xf32> to vector<22x22xf32>
    %4 = vector.shape_cast %1 : vector<22x22xf32> to vector<1x1x22x22xf32>
    tpu.vector_store %arg4[%c0_1, %c0_2, %c0_3, %c0_4], %4 {strides = array<i32>} : memref<1x2x22x22xf32, #tpu.memory_space<vmem>>, vector<1x1x22x22xf32>,
    %c1 = arith.constant 1 : index
    %c0_5 = arith.constant 0 : index
    %5 = memref.load %arg2[%c1, %c0_5] : memref<3x2xf32, #tpu.memory_space<smem>>
    %6 = vector.broadcast %5 : f32 to vector<20x20xf32>
    %c0_6 = arith.constant 0 : index
    %c0_7 = arith.constant 0 : index
    %c1_8 = arith.constant 1 : index
    %c1_9 = arith.constant 1 : index
    %7 = vector.load %arg4[%c0_6, %c0_7, %c1_8, %c1_9] : memref<1x2x22x22xf32, #tpu.memory_space<vmem>>, vector<1x1x20x20xf32>
    %8 = vector.shape_cast %7 : vector<1x1x20x20xf32> to vector<20x20xf32>
    %9 = vector.shape_cast %6 : vector<20x20xf32> to vector<1x1x20x20xf32>
    tpu.vector_store %arg4[%c0_6, %c0_7, %c1_8, %c1_9], %9 {strides = array<i32>} : memref<1x2x22x22xf32, #tpu.memory_space<vmem>>, vector<1x1x20x20xf32>,
    %c2 = arith.constant 2 : index
    %c0_10 = arith.constant 0 : index
    %10 = memref.load %arg2[%c2, %c0_10] : memref<3x2xf32, #tpu.memory_space<smem>>
    %11 = vector.broadcast %10 : f32 to vector<18x18xf32>
    %c0_11 = arith.constant 0 : index
    %c0_12 = arith.constant 0 : index
    %c2_13 = arith.constant 2 : index
    %c2_14 = arith.constant 2 : index
    %12 = vector.load %arg4[%c0_11, %c0_12, %c2_13, %c2_14] : memref<1x2x22x22xf32, #tpu.memory_space<vmem>>, vector<1x1x18x18xf32>
    %13 = vector.shape_cast %12 : vector<1x1x18x18xf32> to vector<18x18xf32>
    %14 = vector.shape_cast %11 : vector<18x18xf32> to vector<1x1x18x18xf32>
    tpu.vector_store %arg4[%c0_11, %c0_12, %c2_13, %c2_14], %14 {strides = array<i32>} : memref<1x2x22x22xf32, #tpu.memory_space<vmem>>, vector<1x1x18x18xf32>,
    %c2_15 = arith.constant 2 : index
    %c0_16 = arith.constant 0 : index
    %15 = memref.load %arg2[%c2_15, %c0_16] : memref<3x2xf32, #tpu.memory_space<smem>>
    %16 = vector.broadcast %15 : f32 to vector<16x16xf32>
    %c0_17 = arith.constant 0 : index
    %c0_18 = arith.constant 0 : index
    %17 = memref.load %arg1[%c0_17, %c0_18] : memref<2x3xf32, #tpu.memory_space<smem>>
    %c0_19 = arith.constant 0 : index
    %c0_20 = arith.constant 0 : index
    %c0_21 = arith.constant 0 : index
    %c0_22 = arith.constant 0 : index
    %18 = vector.load %arg3[%c0_19, %c0_20, %c0_21, %c0_22] : memref<1x3x16x16xf32, #tpu.memory_space<vmem>>, vector<1x1x16x16xf32>
    %19 = vector.shape_cast %18 : vector<1x1x16x16xf32> to vector<16x16xf32>
    %20 = vector.broadcast %17 : f32 to vector<16x16xf32>
    %21 = arith.mulf %20, %19 : vector<16x16xf32>
    %22 = arith.addf %16, %21 : vector<16x16xf32>
    %c0_23 = arith.constant 0 : index
    %c1_24 = arith.constant 1 : index
    %23 = memref.load %arg1[%c0_23, %c1_24] : memref<2x3xf32, #tpu.memory_space<smem>>
    %c0_25 = arith.constant 0 : index
    %c1_26 = arith.constant 1 : index
    %c0_27 = arith.constant 0 : index
    %c0_28 = arith.constant 0 : index
    %24 = vector.load %arg3[%c0_25, %c1_26, %c0_27, %c0_28] : memref<1x3x16x16xf32, #tpu.memory_space<vmem>>, vector<1x1x16x16xf32>
    %25 = vector.shape_cast %24 : vector<1x1x16x16xf32> to vector<16x16xf32>
    %26 = vector.broadcast %23 : f32 to vector<16x16xf32>
    %27 = arith.mulf %26, %25 : vector<16x16xf32>
    %28 = arith.addf %22, %27 : vector<16x16xf32>
    %c0_29 = arith.constant 0 : index
    %c2_30 = arith.constant 2 : index
    %29 = memref.load %arg1[%c0_29, %c2_30] : memref<2x3xf32, #tpu.memory_space<smem>>
    %c0_31 = arith.constant 0 : index
    %c2_32 = arith.constant 2 : index
    %c0_33 = arith.constant 0 : index
    %c0_34 = arith.constant 0 : index
    %30 = vector.load %arg3[%c0_31, %c2_32, %c0_33, %c0_34] : memref<1x3x16x16xf32, #tpu.memory_space<vmem>>, vector<1x1x16x16xf32>
    %31 = vector.shape_cast %30 : vector<1x1x16x16xf32> to vector<16x16xf32>
    %32 = vector.broadcast %29 : f32 to vector<16x16xf32>
    %33 = arith.mulf %32, %31 : vector<16x16xf32>
    %34 = arith.addf %28, %33 : vector<16x16xf32>
    %c0_35 = arith.constant 0 : index
    %c0_36 = arith.constant 0 : index
    %c3 = arith.constant 3 : index
    %c3_37 = arith.constant 3 : index
    %35 = vector.load %arg4[%c0_35, %c0_36, %c3, %c3_37] : memref<1x2x22x22xf32, #tpu.memory_space<vmem>>, vector<1x1x16x16xf32>
    %36 = vector.shape_cast %35 : vector<1x1x16x16xf32> to vector<16x16xf32>
    %37 = vector.shape_cast %34 : vector<16x16xf32> to vector<1x1x16x16xf32>
    tpu.vector_store %arg4[%c0_35, %c0_36, %c3, %c3_37], %37 {strides = array<i32>} : memref<1x2x22x22xf32, #tpu.memory_space<vmem>>, vector<1x1x16x16xf32>,
    %c0_38 = arith.constant 0 : index
    %c1_39 = arith.constant 1 : index
    %38 = memref.load %arg2[%c0_38, %c1_39] : memref<3x2xf32, #tpu.memory_space<smem>>
    %39 = vector.broadcast %38 : f32 to vector<22x22xf32>
    %c0_40 = arith.constant 0 : index
    %c1_41 = arith.constant 1 : index
    %c0_42 = arith.constant 0 : index
    %c0_43 = arith.constant 0 : index
    %40 = vector.load %arg4[%c0_40, %c1_41, %c0_42, %c0_43] : memref<1x2x22x22xf32, #tpu.memory_space<vmem>>, vector<1x1x22x22xf32>
    %41 = vector.shape_cast %40 : vector<1x1x22x22xf32> to vector<22x22xf32>
    %42 = vector.shape_cast %39 : vector<22x22xf32> to vector<1x1x22x22xf32>
    tpu.vector_store %arg4[%c0_40, %c1_41, %c0_42, %c0_43], %42 {strides = array<i32>} : memref<1x2x22x22xf32, #tpu.memory_space<vmem>>, vector<1x1x22x22xf32>,
    %c1_44 = arith.constant 1 : index
    %c1_45 = arith.constant 1 : index
    %43 = memref.load %arg2[%c1_44, %c1_45] : memref<3x2xf32, #tpu.memory_space<smem>>
    %44 = vector.broadcast %43 : f32 to vector<20x20xf32>
    %c0_46 = arith.constant 0 : index
    %c1_47 = arith.constant 1 : index
    %c1_48 = arith.constant 1 : index
    %c1_49 = arith.constant 1 : index
    %45 = vector.load %arg4[%c0_46, %c1_47, %c1_48, %c1_49] : memref<1x2x22x22xf32, #tpu.memory_space<vmem>>, vector<1x1x20x20xf32>
    %46 = vector.shape_cast %45 : vector<1x1x20x20xf32> to vector<20x20xf32>
    %47 = vector.shape_cast %44 : vector<20x20xf32> to vector<1x1x20x20xf32>
    tpu.vector_store %arg4[%c0_46, %c1_47, %c1_48, %c1_49], %47 {strides = array<i32>} : memref<1x2x22x22xf32, #tpu.memory_space<vmem>>, vector<1x1x20x20xf32>,
    %c2_50 = arith.constant 2 : index
    %c1_51 = arith.constant 1 : index
    %48 = memref.load %arg2[%c2_50, %c1_51] : memref<3x2xf32, #tpu.memory_space<smem>>
    %49 = vector.broadcast %48 : f32 to vector<18x18xf32>
    %c0_52 = arith.constant 0 : index
    %c1_53 = arith.constant 1 : index
    %c2_54 = arith.constant 2 : index
    %c2_55 = arith.constant 2 : index
    %50 = vector.load %arg4[%c0_52, %c1_53, %c2_54, %c2_55] : memref<1x2x22x22xf32, #tpu.memory_space<vmem>>, vector<1x1x18x18xf32>
    %51 = vector.shape_cast %50 : vector<1x1x18x18xf32> to vector<18x18xf32>
    %52 = vector.shape_cast %49 : vector<18x18xf32> to vector<1x1x18x18xf32>
    tpu.vector_store %arg4[%c0_52, %c1_53, %c2_54, %c2_55], %52 {strides = array<i32>} : memref<1x2x22x22xf32, #tpu.memory_space<vmem>>, vector<1x1x18x18xf32>,
    %c2_56 = arith.constant 2 : index
    %c1_57 = arith.constant 1 : index
    %53 = memref.load %arg2[%c2_56, %c1_57] : memref<3x2xf32, #tpu.memory_space<smem>>
    %54 = vector.broadcast %53 : f32 to vector<16x16xf32>
    %c1_58 = arith.constant 1 : index
    %c0_59 = arith.constant 0 : index
    %55 = memref.load %arg1[%c1_58, %c0_59] : memref<2x3xf32, #tpu.memory_space<smem>>
    %c0_60 = arith.constant 0 : index
    %c0_61 = arith.constant 0 : index
    %c0_62 = arith.constant 0 : index
    %c0_63 = arith.constant 0 : index
    %56 = vector.load %arg3[%c0_60, %c0_61, %c0_62, %c0_63] : memref<1x3x16x16xf32, #tpu.memory_space<vmem>>, vector<1x1x16x16xf32>
    %57 = vector.shape_cast %56 : vector<1x1x16x16xf32> to vector<16x16xf32>
    %58 = vector.broadcast %55 : f32 to vector<16x16xf32>
    %59 = arith.mulf %58, %57 : vector<16x16xf32>
    %60 = arith.addf %54, %59 : vector<16x16xf32>
    %c1_64 = arith.constant 1 : index
    %c1_65 = arith.constant 1 : index
    %61 = memref.load %arg1[%c1_64, %c1_65] : memref<2x3xf32, #tpu.memory_space<smem>>
    %c0_66 = arith.constant 0 : index
    %c1_67 = arith.constant 1 : index
    %c0_68 = arith.constant 0 : index
    %c0_69 = arith.constant 0 : index
    %62 = vector.load %arg3[%c0_66, %c1_67, %c0_68, %c0_69] : memref<1x3x16x16xf32, #tpu.memory_space<vmem>>, vector<1x1x16x16xf32>
    %63 = vector.shape_cast %62 : vector<1x1x16x16xf32> to vector<16x16xf32>
    %64 = vector.broadcast %61 : f32 to vector<16x16xf32>
    %65 = arith.mulf %64, %63 : vector<16x16xf32>
    %66 = arith.addf %60, %65 : vector<16x16xf32>
    %c1_70 = arith.constant 1 : index
    %c2_71 = arith.constant 2 : index
    %67 = memref.load %arg1[%c1_70, %c2_71] : memref<2x3xf32, #tpu.memory_space<smem>>
    %c0_72 = arith.constant 0 : index
    %c2_73 = arith.constant 2 : index
    %c0_74 = arith.constant 0 : index
    %c0_75 = arith.constant 0 : index
    %68 = vector.load %arg3[%c0_72, %c2_73, %c0_74, %c0_75] : memref<1x3x16x16xf32, #tpu.memory_space<vmem>>, vector<1x1x16x16xf32>
    %69 = vector.shape_cast %68 : vector<1x1x16x16xf32> to vector<16x16xf32>
    %70 = vector.broadcast %67 : f32 to vector<16x16xf32>
    %71 = arith.mulf %70, %69 : vector<16x16xf32>
    %72 = arith.addf %66, %71 : vector<16x16xf32>
    %c0_76 = arith.constant 0 : index
    %c1_77 = arith.constant 1 : index
    %c3_78 = arith.constant 3 : index
    %c3_79 = arith.constant 3 : index
    %73 = vector.load %arg4[%c0_76, %c1_77, %c3_78, %c3_79] : memref<1x2x22x22xf32, #tpu.memory_space<vmem>>, vector<1x1x16x16xf32>
    %74 = vector.shape_cast %73 : vector<1x1x16x16xf32> to vector<16x16xf32>
    %75 = vector.shape_cast %72 : vector<16x16xf32> to vector<1x1x16x16xf32>
    tpu.vector_store %arg4[%c0_76, %c1_77, %c3_78, %c3_79], %75 {strides = array<i32>} : memref<1x2x22x22xf32, #tpu.memory_space<vmem>>, vector<1x1x16x16xf32>,
    return
  }
  func.func @transform_0(%arg0: i32) -> (i32, i32) {
    %c0_i32 = arith.constant 0 : i32
    %c0_i32_0 = arith.constant 0 : i32
    %c0_i32_1 = arith.constant 0 : i32
    return %c0_i32, %c0_i32_0 : i32, i32
  }
  func.func @transform_1(%arg0: i32) -> (i32, i32) {
    %c0_i32 = arith.constant 0 : i32
    %c0_i32_0 = arith.constant 0 : i32
    %c0_i32_1 = arith.constant 0 : i32
    return %c0_i32, %c0_i32_0 : i32, i32
  }
  func.func @transform_2(%arg0: i32) -> (i32, i32, i32, i32) {
    %c0_i32 = arith.constant 0 : i32
    %c0_i32_0 = arith.constant 0 : i32
    %c0_i32_1 = arith.constant 0 : i32
    %c0_i32_2 = arith.constant 0 : i32
    return %arg0, %c0_i32, %c0_i32_0, %c0_i32_1 : i32, i32, i32, i32
  }
  func.func @transform_3(%arg0: i32) -> (i32, i32, i32, i32) {
    %c0_i32 = arith.constant 0 : i32
    %c0_i32_0 = arith.constant 0 : i32
    %c0_i32_1 = arith.constant 0 : i32
    %c0_i32_2 = arith.constant 0 : i32
    return %arg0, %c0_i32, %c0_i32_0, %c0_i32_1 : i32, i32, i32, i32
  }
}

</mosaic_0001>

<llo_original>
// kernel: tpu_custom_call.1
$region0: #{tpu_custom_call.1}
  #allocation0 [shape = 'u32[]', space=smem, size = 0x4, offset = 0x4, fixed_abs, tag = 'smem constant byte address 0x4 - core index']
  #allocation1 [shape = 'u32[144,128]{1,0:T(1,128)}', space=vmem, size = 0x12000, scoped, tag = 'internal scratch']
  %s0 = inlined_call_operand.vmem [shape: f32[2,3], index: 0, kind: input, shape index: {}]
  %s1 = inlined_call_operand.vmem [shape: f32[3,2], index: 1, kind: input, shape index: {}]
  %s2 = inlined_call_operand.hbm [shape: f32[2,3,16,16], index: 2, kind: input, shape index: {}]
  %s3 = inlined_call_operand.vmem [shape: f32[2,2,22,22], index: 3, kind: output, shape index: {}]
  %s4 = sld [smem:[#allocation0]]
  $region57: #{tpu_custom_call.1} parent=0
    _
  %s6 = ssub.s32 1, %s4
  %s7 = scalar_select 0, %s6, %s4
  $region1: #{tpu_custom_call.1} parent=0
    #allocation2 [shape = 'u8[1024]{0}', space=smem, size = 0x400, scoped, tag = 'input window, operand 0, single buffered']
    #allocation3 [shape = 's32[2]{0}', space=sflag, size = 0x8, scoped, tag = 'scoped memory for tpu_custom_call.1']
    #allocation4 [shape = 's32[2]{0}', space=sflag, size = 0x8, scoped, tag = 'scoped memory for tpu_custom_call.1']
    #allocation5 [shape = 'u8[2048]{0}', space=smem, size = 0x800, scoped, tag = 'input window, operand 1, single buffered']
    #allocation6 [shape = 's32[1]{0}', space=sflag, size = 0x4, scoped, tag = 'scoped memory for tpu_custom_call.1']
    #allocation7 [shape = 'u8[49152]{0}', space=vmem, size = 0xc000, scoped, tag = 'input window, operand 2']
    %8 = vsyncpa [#allocation4], 0
    %9 = vsyncpa [#allocation6], 0
    %10 = vsyncpa [#allocation3], 0
    %s11 = scalar_lea.sflag [#allocation3], 1
    %12 = vsyncpa %s11, 0
    loop: start=0, step=1, limit=4
    $region2: #{tpu_custom_call.1} parent=1 // loop_pre_header
      _
    $region3: #{tpu_custom_call.1} parent=1 // loop_header
      %s14 = sphi 0, %s18
      %p15 = scmp.ge.s32.totalorder %s14, 4
      %s22 = sphi 0, %s22
      %s24 = sphi 0, %s22
      %s25 = sphi 0, %s24
      %s39 = sphi 0, %s25
      %s43 = sphi 0, %s43
      %s45 = sphi 0, %s43
      %s46 = sphi 0, %s45
      %s60 = sphi 0, %s46
      %s66 = sphi 0, %s68
      %s69 = sphi 0, %s66
      %s70 = sphi 0, %s69
      %s86 = sphi 0, %s70
      %s92 = sphi 0, %s94
      %s95 = sphi 0, %s92
      %s96 = sphi 0, %s95
      %s112 = sphi 0, %s96
    $region4: #{tpu_custom_call.1} parent=1 // loop_header_branch
      %17 = sbr.rel (%p15) target = $region8
    $region5: #{tpu_custom_call.1} parent=1 // loop_body
      %s19 = ssub.s32 %s14, 1
      %s20 = ssub.s32 %s14, 2
      %s21 = sadd.s32 %s14, 1
      %s23 = sadd.s32 %s22, 1
      %p26 = scmp.eq.s32.totalorder %s14, 1
      %p27 = scmp.ne.s32.totalorder %s22, %s24
      %p28 = scmp.eq.s32.totalorder %s14, 0
      %p29 = por %p27, %p28
      %p30 = scmp.ne.s32.totalorder %s22, %s24
      %p31 = scmp.eq.s32.totalorder %s19, 1
      %p32 = por %p30, %p31
      %p33 = scmp.ne.s32.totalorder %s24, %s25
      %p34 = scmp.eq.s32.totalorder %s19, 0
      %p35 = por %p33, %p34
      %p36 = scmp.ne.s32.totalorder %s24, %s25
      %p37 = scmp.eq.s32.totalorder %s20, 1
      %p38 = por %p36, %p37
      %p40 = scmp.ne.s32.totalorder %s25, %s39
      %p41 = scmp.eq.s32.totalorder %s20, 0
      %p42 = por %p40, %p41
      %s44 = sadd.s32 %s43, 1
      %p47 = scmp.eq.s32.totalorder %s14, 1
      %p48 = scmp.ne.s32.totalorder %s43, %s45
      %p49 = scmp.eq.s32.totalorder %s14, 0
      %p50 = por %p48, %p49
      %p51 = scmp.ne.s32.totalorder %s43, %s45
      %p52 = scmp.eq.s32.totalorder %s19, 1
      %p53 = por %p51, %p52
      %p54 = scmp.ne.s32.totalorder %s45, %s46
      %p55 = scmp.eq.s32.totalorder %s19, 0
      %p56 = por %p54, %p55
      %p57 = scmp.ne.s32.totalorder %s45, %s46
      %p58 = scmp.eq.s32.totalorder %s20, 1
      %p59 = por %p57, %p58
      %p61 = scmp.ne.s32.totalorder %s46, %s60
      %p62 = scmp.eq.s32.totalorder %s20, 0
      %p63 = por %p61, %p62
      %s64 = ssub.s32 %s14, %s21
      %p65 = scmp.eq.s32.totalorder %s64, 0
      %s67 = sadd.s32 %s66, 1
      %s68 = scalar_select %p65, %s66, %s67
      %p71 = pneg %p65
      %p72 = scmp.eq.s32.totalorder %s14, 1
      %p73 = por %p71, %p72
      %p74 = scmp.ne.s32.totalorder %s66, %s69
      %p75 = scmp.eq.s32.totalorder %s14, 0
      %p76 = por %p74, %p75
      %p77 = scmp.ne.s32.totalorder %s66, %s69
      %p78 = scmp.eq.s32.totalorder %s19, 1
      %p79 = por %p77, %p78
      %p80 = scmp.ne.s32.totalorder %s69, %s70
      %p81 = scmp.eq.s32.totalorder %s19, 0
      %p82 = por %p80, %p81
      %p83 = scmp.ne.s32.totalorder %s69, %s70
      %p84 = scmp.eq.s32.totalorder %s20, 1
      %p85 = por %p83, %p84
      %p87 = scmp.ne.s32.totalorder %s70, %s86
      %p88 = scmp.eq.s32.totalorder %s20, 0
      %p89 = por %p87, %p88
      %s90 = ssub.s32 %s14, %s21
      %p91 = scmp.eq.s32.totalorder %s90, 0
      %s93 = sadd.s32 %s92, 1
      %s94 = scalar_select %p91, %s92, %s93
      %p97 = pneg %p91
      %p98 = scmp.eq.s32.totalorder %s14, 1
      %p99 = por %p97, %p98
      %p100 = scmp.ne.s32.totalorder %s92, %s95
      %p101 = scmp.eq.s32.totalorder %s14, 0
      %p102 = por %p100, %p101
      %p103 = scmp.ne.s32.totalorder %s92, %s95
      %p104 = scmp.eq.s32.totalorder %s19, 1
      %p105 = por %p103, %p104
      %p106 = scmp.ne.s32.totalorder %s95, %s96
      %p107 = scmp.eq.s32.totalorder %s19, 0
      %p108 = por %p106, %p107
      %p109 = scmp.ne.s32.totalorder %s95, %s96
      %p110 = scmp.eq.s32.totalorder %s20, 1
      %p111 = por %p109, %p110
      %p113 = scmp.ne.s32.totalorder %s96, %s112
      %p114 = scmp.eq.s32.totalorder %s20, 0
      %p115 = por %p113, %p114
      %p116 = scmp.le.s32.totalorder 1, %s14
      %p117 = scmp.lt.s32.totalorder %s14, 3
      %p118 = pnand %p116, %p117
      %p119 = pneg %p118
      // Predicated region
      $region9: #{tpu_custom_call.1} parent=5 // pred_check
        _
      $region10: #{tpu_custom_call.1} parent=5 // pred_check_branch
        %121 = sbr.rel (%p118) target = $region12
      $region11: #{tpu_custom_call.1} parent=5 // pred_region
        %s122 = ssub.s32 %s14, 1
        // Predicated region
        $region13: #{tpu_custom_call.1} parent=11 // pred_check
          %p123 = pneg %p35
        $region14: #{tpu_custom_call.1} parent=11 // pred_check_branch
          %125 = sbr.rel (%p123) target = $region16
        $region15: #{tpu_custom_call.1} parent=11 // pred_region
          %s127 = ssub.s32 32, 32
          %128 = vsyncadd [#allocation4], %s127
          %s130 = sshll.u32 %s0, 4
          %s131 = int_to_ptr.vmem [resolvable:$true] %s130
          %133 = dma.vmem_to_smem %s131, 32, [#allocation2], [#allocation4]
        $region16: #{tpu_custom_call.1} parent=11 // pred_fallthru
          _
        // Predicated region
        $region17: #{tpu_custom_call.1} parent=11 // pred_check
          %p134 = pneg %p56
        $region18: #{tpu_custom_call.1} parent=11 // pred_check_branch
          %136 = sbr.rel (%p134) target = $region20
        $region19: #{tpu_custom_call.1} parent=11 // pred_region
          %s138 = ssub.s32 64, 64
          %139 = vsyncadd [#allocation6], %s138
          %s141 = sshll.u32 %s1, 4
          %s142 = int_to_ptr.vmem [resolvable:$true] %s141
          %144 = dma.vmem_to_smem %s142, 64, [#allocation5], [#allocation6]
        $region20: #{tpu_custom_call.1} parent=11 // pred_fallthru
          _
      $region12: #{tpu_custom_call.1} parent=5 // pred_fallthru
        _
      %p145 = scmp.lt.s32.totalorder %s14, 2
      // Predicated region
      $region21: #{tpu_custom_call.1} parent=5 // pred_check
        %p146 = pneg %p145
      $region22: #{tpu_custom_call.1} parent=5 // pred_check_branch
        %148 = sbr.rel (%p146) target = $region24
      $region23: #{tpu_custom_call.1} parent=5 // pred_region
        // Predicated region
        $region25: #{tpu_custom_call.1} parent=23 // pred_check
          %p149 = pneg %p76
        $region26: #{tpu_custom_call.1} parent=23 // pred_check_branch
          %151 = sbr.rel (%p149) target = $region28
        $region27: #{tpu_custom_call.1} parent=23 // pred_region
          %s152 = sand.u32 %s66, 1
          %s153 = scalar_lea.sflag [#allocation3], %s152
          %s154 = sand.u32 %s66, 1
          %s155 = smul.addr %s154, 48
          %s156 = scalar_lea.vmem [#allocation7], %s155
          %s158 = ssub.s32 768, 768
          %159 = vsyncadd %s153, %s158
          %s160 = smul.addr %s14, 6
          %s161 = smul.addr %s160, 128
          %s162 = scalar_lea.hbm %s2, %s161
          %s163 = sshll.u32 %s156, 4
          %s164 = int_to_ptr.vmem [resolvable:$true] %s163
          %169 = dma.hbm_to_vmem [thread:$0]  %s162, 768, %s164, %s153, 128, 128, 8
        $region28: #{tpu_custom_call.1} parent=23 // pred_fallthru
          _
      $region24: #{tpu_custom_call.1} parent=5 // pred_fallthru
        _
      %p170 = scmp.le.s32.totalorder 1, %s14
      %p171 = scmp.lt.s32.totalorder %s14, 3
      %p172 = pnand %p170, %p171
      %p173 = pneg %p172
      // Predicated region
      $region29: #{tpu_custom_call.1} parent=5 // pred_check
        _
      $region30: #{tpu_custom_call.1} parent=5 // pred_check_branch
        %175 = sbr.rel (%p172) target = $region32
      $region31: #{tpu_custom_call.1} parent=5 // pred_region
        %s176 = ssub.s32 %s14, 1
        // Predicated region
        $region33: #{tpu_custom_call.1} parent=31 // pred_check
          %p177 = pneg %p35
        $region34: #{tpu_custom_call.1} parent=31 // pred_check_branch
          %179 = sbr.rel (%p177) target = $region36
        $region35: #{tpu_custom_call.1} parent=31 // pred_region
          %180 = dma.done [#allocation4], 32
        $region36: #{tpu_custom_call.1} parent=31 // pred_fallthru
          _
        // Predicated region
        $region37: #{tpu_custom_call.1} parent=31 // pred_check
          %p181 = pneg %p56
        $region38: #{tpu_custom_call.1} parent=31 // pred_check_branch
          %183 = sbr.rel (%p181) target = $region40
        $region39: #{tpu_custom_call.1} parent=31 // pred_region
          %184 = dma.done [#allocation6], 64
        $region40: #{tpu_custom_call.1} parent=31 // pred_fallthru
          _
        %s185 = sand.u32 %s69, 1
        %s186 = scalar_lea.sflag [#allocation3], %s185
        %s187 = sand.u32 %s69, 1
        %s188 = smul.addr %s187, 48
        %s189 = scalar_lea.vmem [#allocation7], %s188
        // Predicated region
        $region41: #{tpu_custom_call.1} parent=31 // pred_check
          %p190 = pneg %p82
        $region42: #{tpu_custom_call.1} parent=31 // pred_check_branch
          %192 = sbr.rel (%p190) target = $region44
        $region43: #{tpu_custom_call.1} parent=31 // pred_region
          %193 = dma.done %s186, 768
        $region44: #{tpu_custom_call.1} parent=31 // pred_fallthru
          _
        %194 = sfence
        %p195 = pneg %p35
        %p196 = pneg %p32
        %p197 = pneg %p56
        %p198 = pneg %p53
        %s199 = sand.u32 %s69, 1
        %s200 = scalar_lea.sflag [#allocation3], %s199
        %s201 = sand.u32 %s69, 1
        %s202 = smul.addr %s201, 48
        %s203 = scalar_lea.vmem [#allocation7], %s202
        %p204 = pneg %p82
        %p205 = pneg %p79
        %p206 = pneg %p108
        %p207 = pneg %p105
        %p208 = scmp.lt.s32.totalorder %s19, 1
        %s209 = scalar_select %p208, %s19, 1
        %s210 = smul.addr %s209, 6
        %s211 = smul.addr %s210, 8
        %s212 = scalar_lea.vmem %s3, %s211
        %p213 = scmp.lt.s32.totalorder %s19, 1
        %s214 = scalar_select %p213, %s19, 1
        %s215 = smul.addr %s214, 6
        %s216 = smul.addr %s215, 8
        %s217 = scalar_lea.vmem %s3, %s216
        %s218 = sld [smem:[#allocation5]]
        %v219 = vstv %s218
        %vm220 = vcmask 179200
        %221 = vst.msk [vmem:[%s217] sm:$0xff] %vm220, %v219
        %222 = vst.msk [vmem:[%s217 + $0x8] sm:$0xff] %vm220, %v219
        %vm223 = vcmask 177152
        %224 = vst.msk [vmem:[%s217 + $0x10] sm:$0x3f] %vm223, %v219
        %s225 = sld [smem:[#allocation5 + $0x80]]
        %v226 = vstv %s225
        %vm227 = vcmask 171016
        %228 = vst.msk [vmem:[%s217 + $0x1] sm:$0xff] %vm227, %v226
        %229 = vst.msk [vmem:[%s217 + $0x9] sm:$0xff] %vm227, %v226
        %vm230 = vcmask 166920
        %231 = vst.msk [vmem:[%s217 + $0x11] sm:$0xf] %vm230, %v226
        %s232 = sld [smem:[#allocation5 + $0x100]]
        %v233 = vstv %s232
        %vm234 = vcmask 162832
        %235 = vst.msk [vmem:[%s217 + $0x2] sm:$0xff] %vm234, %v233
        %236 = vst.msk [vmem:[%s217 + $0xa] sm:$0xff] %vm234, %v233
        %vm237 = vcmask 156688
        %238 = vst.msk [vmem:[%s217 + $0x12] sm:$0x3] %vm237, %v233
        %s239 = sld [smem:[#allocation5 + $0x100]]
        %v240 = vstv %s239
        %s241 = sld [smem:[#allocation2]]
        %v242 = vld [vmem:[%s189] sm:$0xff]
        %v243 = vld [vmem:[%s189 + $0x8] sm:$0xff]
        %v244 = vstv %s241
        %v245 = vmul.f32 %v244, %v242
        %v246 = vmul.f32 %v244, %v243
        %v247 = vadd.f32 %v240, %v245
        %v248 = vadd.f32 %v240, %v246
        %s249 = sld [smem:[#allocation2 + $0x1]]
        %s250 = scalar_lea.vmem %s189, 16 [#allocation7]
        %v251 = vld [vmem:[%s250] sm:$0xff]
        %v252 = vld [vmem:[%s250 + $0x8] sm:$0xff]
        %v253 = vstv %s249
        %v254 = vmul.f32 %v253, %v251
        %v255 = vmul.f32 %v253, %v252
        %v256 = vadd.f32 %v247, %v254
        %v257 = vadd.f32 %v248, %v255
        %s258 = sld [smem:[#allocation2 + $0x2]]
        %s259 = scalar_lea.vmem %s189, 32 [#allocation7]
        %v260 = vld [vmem:[%s259] sm:$0xff]
        %v261 = vld [vmem:[%s259 + $0x8] sm:$0xff]
        %v262 = vstv %s258
        %v263 = vmul.f32 %v262, %v260
        %v264 = vmul.f32 %v262, %v261
        %v265 = vadd.f32 %v256, %v263
        %v266 = vadd.f32 %v257, %v264
        %269 = vrot.lane.b32.xlu0 %v265, 3
        %v270 = vpop.permute.xlu0 %269
        %271 = vrot.lane.b32.xlu0 %v266, 3
        %v272 = vpop.permute.xlu0 %271
        %vm275 = vcmask 154648
        %276 = vst.msk [vmem:[%s217 + $0x3] sm:$0xff] %vm275, %v270
        %277 = vst.msk [vmem:[%s217 + $0xb] sm:$0xff] %vm275, %v272
        %s278 = sld [smem:[#allocation5 + $0x1]]
        %v279 = vstv %s278
        %s280 = scalar_lea.vmem %s217, 24
        %281 = vst.msk [vmem:[%s280] sm:$0xff] %vm220, %v279
        %282 = vst.msk [vmem:[%s280 + $0x8] sm:$0xff] %vm220, %v279
        %283 = vst.msk [vmem:[%s280 + $0x10] sm:$0x3f] %vm223, %v279
        %s284 = sld [smem:[#allocation5 + $0x81]]
        %v285 = vstv %s284
        %286 = vst.msk [vmem:[%s280 + $0x1] sm:$0xff] %vm227, %v285
        %287 = vst.msk [vmem:[%s280 + $0x9] sm:$0xff] %vm227, %v285
        %288 = vst.msk [vmem:[%s280 + $0x11] sm:$0xf] %vm230, %v285
        %s289 = sld [smem:[#allocation5 + $0x101]]
        %v290 = vstv %s289
        %291 = vst.msk [vmem:[%s280 + $0x2] sm:$0xff] %vm234, %v290
        %292 = vst.msk [vmem:[%s280 + $0xa] sm:$0xff] %vm234, %v290
        %293 = vst.msk [vmem:[%s280 + $0x12] sm:$0x3] %vm237, %v290
        %s294 = sld [smem:[#allocation5 + $0x101]]
        %v295 = vstv %s294
        %s296 = sld [smem:[#allocation2 + $0x80]]
        %v297 = vld [vmem:[%s189] sm:$0xff]
        %v298 = vld [vmem:[%s189 + $0x8] sm:$0xff]
        %v299 = vstv %s296
        %v300 = vmul.f32 %v299, %v297
        %v301 = vmul.f32 %v299, %v298
        %v302 = vadd.f32 %v295, %v300
        %v303 = vadd.f32 %v295, %v301
        %s304 = sld [smem:[#allocation2 + $0x81]]
        %v305 = vld [vmem:[%s250] sm:$0xff]
        %v306 = vld [vmem:[%s250 + $0x8] sm:$0xff]
        %v307 = vstv %s304
        %v308 = vmul.f32 %v307, %v305
        %v309 = vmul.f32 %v307, %v306
        %v310 = vadd.f32 %v302, %v308
        %v311 = vadd.f32 %v303, %v309
        %s312 = sld [smem:[#allocation2 + $0x82]]
        %v313 = vld [vmem:[%s259] sm:$0xff]
        %v314 = vld [vmem:[%s259 + $0x8] sm:$0xff]
        %v315 = vstv %s312
        %v316 = vmul.f32 %v315, %v313
        %v317 = vmul.f32 %v315, %v314
        %v318 = vadd.f32 %v310, %v316
        %v319 = vadd.f32 %v311, %v317
        %322 = vrot.lane.b32.xlu0 %v318, 3
        %v323 = vpop.permute.xlu0 %322
        %324 = vrot.lane.b32.xlu0 %v319, 3
        %v325 = vpop.permute.xlu0 %324
        %328 = vst.msk [vmem:[%s280 + $0x3] sm:$0xff] %vm275, %v323
        %329 = vst.msk [vmem:[%s280 + $0xb] sm:$0xff] %vm275, %v325
        %p330 = scmp.lt.s32.totalorder %s19, 1
        %s331 = scalar_select %p330, %s19, 1
        %s332 = smul.addr %s331, 6
        %s333 = smul.addr %s332, 8
        %s334 = scalar_lea.vmem %s3, %s333
        // Predicated region
        $region45: #{tpu_custom_call.1} parent=31 // pred_check
          %p335 = pneg %p105
        $region46: #{tpu_custom_call.1} parent=31 // pred_check_branch
          %337 = sbr.rel (%p335) target = $region48
        $region47: #{tpu_custom_call.1} parent=31 // pred_region
          _
        $region48: #{tpu_custom_call.1} parent=31 // pred_fallthru
          _
      $region32: #{tpu_custom_call.1} parent=5 // pred_fallthru
        _
      %p338 = scmp.le.s32.totalorder 2, %s14
      // Predicated region
      $region49: #{tpu_custom_call.1} parent=5 // pred_check
        %p339 = pneg %p338
      $region50: #{tpu_custom_call.1} parent=5 // pred_check_branch
        %341 = sbr.rel (%p339) target = $region52
      $region51: #{tpu_custom_call.1} parent=5 // pred_region
        %s342 = ssub.s32 %s14, 2
        // Predicated region
        $region53: #{tpu_custom_call.1} parent=51 // pred_check
          %p343 = pneg %p111
        $region54: #{tpu_custom_call.1} parent=51 // pred_check_branch
          %345 = sbr.rel (%p343) target = $region56
        $region55: #{tpu_custom_call.1} parent=51 // pred_region
          %p346 = scmp.lt.s32.totalorder %s20, 1
          %s347 = scalar_select %p346, %s20, 1
          %s348 = smul.addr %s347, 6
          %s349 = smul.addr %s348, 8
          %s350 = scalar_lea.vmem %s3, %s349
        $region56: #{tpu_custom_call.1} parent=51 // pred_fallthru
          _
      $region52: #{tpu_custom_call.1} parent=5 // pred_fallthru
        _
    $region6: #{tpu_custom_call.1} parent=1 // loop_footer
      %s18 = sadd.s32 1, %s14
    $region7: #{tpu_custom_call.1} parent=1 // loop_footer_branch
      %13 = sbr.rel target = $region3
    $region8: #{tpu_custom_call.1} parent=1 // loop_exit
      _
    %351 = vsyncpa [#allocation3], 1
    %s352 = scalar_lea.sflag [#allocation3], 1
    %353 = vsyncpa %s352, 1
    %354 = vsyncpa [#allocation4], 1
    %s355 = scalar_lea.sflag [#allocation4], 1
    %356 = vsyncpa %s355, 1
    %357 = vsyncpa [#allocation6], 1

</llo_original>
